<compile_context>
chip_gen: v7x
topology: tpu7x:2x2x1
jax: 0.10.0
libtpu: 0.0.40
codegen_flags: <defaults>
</compile_context>

<pallas_src>
from functools import partial

import jax
import jax.numpy as jnp
from jax.experimental import pallas as pl
from jax.experimental.pallas import tpu as pltpu


_VMEM_LIMIT = 32 * 1024 * 1024  # bytes; fits v7x (64 MiB) as well as v5e/v6e (128 MiB)


def _cparams(semantics):
    return pltpu.CompilerParams(dimension_semantics=semantics,
                                vmem_limit_bytes=_VMEM_LIMIT)


# ---------------------------------------------------------------------------
# Kernels
# ---------------------------------------------------------------------------
def _linear_kernel(x_ref, w_ref, b_ref, o_ref):
    # y = x @ w + b  (bf16 MXU inputs, f32 accumulate)
    y = jnp.dot(x_ref[...].astype(jnp.bfloat16),
                w_ref[...].astype(jnp.bfloat16),
                preferred_element_type=jnp.float32)
    o_ref[...] = y + b_ref[...]


def pallas_linear(x, w, b, *, tm=256):
    """y = x @ w + b; x:(M,K) w:(K,N) b:(N,). M-tiled ('parallel') grid."""
    M, K = x.shape
    N = w.shape[1]
    if M % tm != 0:
        tm = M  # small / ragged M: single step
    return pl.pallas_call(
        _linear_kernel,
        out_shape=jax.ShapeDtypeStruct((M, N), jnp.float32),
        grid=(M // tm,),
        in_specs=[
            pl.BlockSpec((tm, K), lambda i: (i, 0)),
            pl.BlockSpec((K, N), lambda i: (0, 0)),
            pl.BlockSpec((1, N), lambda i: (0, 0)),
        ],
        out_specs=pl.BlockSpec((tm, N), lambda i: (i, 0)),
        compiler_params=_cparams(("parallel",)),
    )(x, w, b.reshape(1, N))


def _ln_linear_kernel(x_ref, g_ref, beta_ref, w_ref, b_ref, o_ref, *, eps):
    # LayerNorm (f32) fused with the following matmul (bf16 MXU inputs).
    x = x_ref[...]
    mean = jnp.mean(x, axis=-1, keepdims=True)
    var = jnp.mean(jnp.square(x - mean), axis=-1, keepdims=True)
    y = (x - mean) * jax.lax.rsqrt(var + eps) * g_ref[...] + beta_ref[...]
    o_ref[...] = jnp.dot(y.astype(jnp.bfloat16),
                         w_ref[...].astype(jnp.bfloat16),
                         preferred_element_type=jnp.float32) + b_ref[...]


def fused_ln_head(x, g, beta, w, b, *, eps=1e-6):
    """final_LN(x) @ w + b; x:(M,D) (class tokens)."""
    M, D = x.shape
    C = w.shape[1]
    return pl.pallas_call(
        partial(_ln_linear_kernel, eps=eps),
        out_shape=jax.ShapeDtypeStruct((M, C), jnp.float32),
        grid=(1,),
        in_specs=[
            pl.BlockSpec((M, D), lambda i: (0, 0)),
            pl.BlockSpec((1, D), lambda i: (0, 0)),
            pl.BlockSpec((1, D), lambda i: (0, 0)),
            pl.BlockSpec((D, C), lambda i: (0, 0)),
            pl.BlockSpec((1, C), lambda i: (0, 0)),
        ],
        out_specs=pl.BlockSpec((M, C), lambda i: (0, 0)),
        compiler_params=_cparams(("arbitrary",)),
    )(x, g.reshape(1, D), beta.reshape(1, D), w, b.reshape(1, C))


def _attn_block_kernel(h_ref, g_ref, beta_ref, qkvw_ref, qkvb_ref,
                       projw_ref, projb_ref, o_ref, *, B, N, H, Dh, eps, scale):
    """Full pre-LN attention sub-block: o = h + proj(MHSA(LN(h)))."""
    D = H * Dh
    qkv_w = qkvw_ref[...].astype(jnp.bfloat16)   # (D, 3D), load once
    qkv_b = qkvb_ref[...]                        # (1, 3D)
    proj_b = projb_ref[...]                      # (1, D)
    gamma = g_ref[...]
    beta = beta_ref[...]

    for b in range(B):                           # static unroll over batch
        hb = h_ref[b]                            # (N, D)
        mean = jnp.mean(hb, axis=-1, keepdims=True)
        var = jnp.mean(jnp.square(hb - mean), axis=-1, keepdims=True)
        yb = (hb - mean) * jax.lax.rsqrt(var + eps) * gamma + beta

        # qkv slab stays resident in VMEM; lane layout is [q_h0..q_hH | k_h0.. | v_h0..]
        qkv = jnp.dot(yb.astype(jnp.bfloat16), qkv_w,
                      preferred_element_type=jnp.float32) + qkv_b   # (N, 3D)

        acc = jnp.zeros((N, D), jnp.float32)
        for hh in range(H):                      # static unroll over heads
            qh = qkv[:, hh * Dh:(hh + 1) * Dh]
            kh = qkv[:, D + hh * Dh:D + (hh + 1) * Dh]
            vh = qkv[:, 2 * D + hh * Dh:2 * D + (hh + 1) * Dh]
            # q @ k^T without materializing a transpose (contract last dims)
            s = jax.lax.dot_general(
                qh.astype(jnp.bfloat16), kh.astype(jnp.bfloat16),
                (((1,), (1,)), ((), ())),
                preferred_element_type=jnp.float32) * scale         # (N, N), f32
            m = jnp.max(s, axis=-1, keepdims=True)
            p = jnp.exp(s - m)
            p = p * pl.reciprocal(jnp.sum(p, axis=-1, keepdims=True), approx=True)
            ah = jnp.dot(p.astype(jnp.bfloat16), vh.astype(jnp.bfloat16),
                         preferred_element_type=jnp.float32)        # (N, Dh)
            # fold the per-head output projection in directly: sum_h ah @ Wproj[h]
            proj_w_h = projw_ref[hh * Dh:(hh + 1) * Dh, :].astype(jnp.bfloat16)
            acc = acc + jnp.dot(ah.astype(jnp.bfloat16), proj_w_h,
                                preferred_element_type=jnp.float32)  # (N, D)

        o_ref[b] = hb + acc + proj_b             # fused residual add


def fused_attention_block(h, blk, *, heads, eps=1e-6):
    """h: (B, N, D) -> (B, N, D); one pallas_call for the whole attention sub-block."""
    B, N, D = h.shape
    Dh = D // heads
    scale = Dh ** -0.5
    kernel = partial(_attn_block_kernel, B=B, N=N, H=heads, Dh=Dh, eps=eps, scale=scale)
    return pl.pallas_call(
        kernel,
        out_shape=jax.ShapeDtypeStruct((B, N, D), jnp.float32),
        grid=(1,),
        in_specs=[
            pl.BlockSpec((B, N, D), lambda i: (0, 0, 0)),
            pl.BlockSpec((1, D), lambda i: (0, 0)),
            pl.BlockSpec((1, D), lambda i: (0, 0)),
            pl.BlockSpec((D, 3 * D), lambda i: (0, 0)),
            pl.BlockSpec((1, 3 * D), lambda i: (0, 0)),
            pl.BlockSpec((D, D), lambda i: (0, 0)),
            pl.BlockSpec((1, D), lambda i: (0, 0)),
        ],
        out_specs=pl.BlockSpec((B, N, D), lambda i: (0, 0, 0)),
        compiler_params=_cparams(("arbitrary",)),
    )(h,
      blk["ln1_g"].reshape(1, D), blk["ln1_b"].reshape(1, D),
      blk["qkv_w"], blk["qkv_b"].reshape(1, 3 * D),
      blk["proj_w"], blk["proj_b"].reshape(1, D))


def _mlp_block_kernel(h_ref, g_ref, beta_ref, w1_ref, b1_ref, w2_ref, b2_ref, o_ref, *, eps):
    """Full pre-LN MLP sub-block: o = h + fc2(GELU(fc1(LN(h))))."""
    h = h_ref[...]
    mean = jnp.mean(h, axis=-1, keepdims=True)
    var = jnp.mean(jnp.square(h - mean), axis=-1, keepdims=True)
    y = (h - mean) * jax.lax.rsqrt(var + eps) * g_ref[...] + beta_ref[...]
    z = jnp.dot(y.astype(jnp.bfloat16), w1_ref[...].astype(jnp.bfloat16),
                preferred_element_type=jnp.float32) + b1_ref[...]
    z = jax.nn.gelu(z, approximate=False)        # exact (erf) GELU, f32
    out = jnp.dot(z.astype(jnp.bfloat16), w2_ref[...].astype(jnp.bfloat16),
                  preferred_element_type=jnp.float32) + b2_ref[...]
    o_ref[...] = h + out                         # fused residual add


def fused_mlp_block(h2d, blk, *, eps=1e-6, tm=256):
    """h2d: (M, D) -> (M, D). Row-tiled ('parallel') grid; weights rebroadcast per tile."""
    M, D = h2d.shape
    Dm = blk["fc1_w"].shape[1]
    if M % tm != 0:
        tm = M
    return pl.pallas_call(
        partial(_mlp_block_kernel, eps=eps),
        out_shape=jax.ShapeDtypeStruct((M, D), jnp.float32),
        grid=(M // tm,),
        in_specs=[
            pl.BlockSpec((tm, D), lambda i: (i, 0)),
            pl.BlockSpec((1, D), lambda i: (0, 0)),
            pl.BlockSpec((1, D), lambda i: (0, 0)),
            pl.BlockSpec((D, Dm), lambda i: (0, 0)),
            pl.BlockSpec((1, Dm), lambda i: (0, 0)),
            pl.BlockSpec((Dm, D), lambda i: (0, 0)),
            pl.BlockSpec((1, D), lambda i: (0, 0)),
        ],
        out_specs=pl.BlockSpec((tm, D), lambda i: (i, 0)),
        compiler_params=_cparams(("parallel",)),
    )(h2d,
      blk["ln2_g"].reshape(1, D), blk["ln2_b"].reshape(1, D),
      blk["fc1_w"], blk["fc1_b"].reshape(1, Dm),
      blk["fc2_w"], blk["fc2_b"].reshape(1, D))


# ---------------------------------------------------------------------------
# Parameter init (deterministic, structural stand-in for pretrained ViT weights)
# ---------------------------------------------------------------------------
def init_vit_params(key, *, in_chans, patch, img, embed_dim, depth, num_heads,
                    mlp_dim, num_classes):
    num_patches = (img // patch) * (img // patch)
    num_tokens = num_patches + 1
    patch_dim = in_chans * patch * patch
    keys = jax.random.split(key, 8 + depth * 8)
    ki = iter(range(len(keys)))

    def w(k, shape, std=0.02):
        return jax.random.normal(keys[k], shape, jnp.float32) * std

    params = {
        "patch": patch,
        "embed_dim": embed_dim,
        "num_heads": num_heads,
        "patch_w": w(next(ki), (patch_dim, embed_dim)),
        "patch_b": jnp.zeros((embed_dim,), jnp.float32),
        "cls_token": w(next(ki), (1, 1, embed_dim)),
        "pos_embed": w(next(ki), (1, num_tokens, embed_dim)),
        "ln_g": jnp.ones((embed_dim,), jnp.float32),
        "ln_b": jnp.zeros((embed_dim,), jnp.float32),
        "head_w": w(next(ki), (embed_dim, num_classes)),
        "head_b": jnp.zeros((num_classes,), jnp.float32),
        "blocks": [],
    }
    for _ in range(depth):
        blk = {
            "ln1_g": jnp.ones((embed_dim,), jnp.float32),
            "ln1_b": jnp.zeros((embed_dim,), jnp.float32),
            "qkv_w": w(next(ki), (embed_dim, 3 * embed_dim)),
            "qkv_b": jnp.zeros((3 * embed_dim,), jnp.float32),
            "proj_w": w(next(ki), (embed_dim, embed_dim)),
            "proj_b": jnp.zeros((embed_dim,), jnp.float32),
            "ln2_g": jnp.ones((embed_dim,), jnp.float32),
            "ln2_b": jnp.zeros((embed_dim,), jnp.float32),
            "fc1_w": w(next(ki), (embed_dim, mlp_dim)),
            "fc1_b": jnp.zeros((mlp_dim,), jnp.float32),
            "fc2_w": w(next(ki), (mlp_dim, embed_dim)),
            "fc2_b": jnp.zeros((embed_dim,), jnp.float32),
        }
        params["blocks"].append(blk)
    return params


# ---------------------------------------------------------------------------
# Forward pass (light glue in JAX, one fused Pallas kernel per sub-block)
# ---------------------------------------------------------------------------
def vit_forward(params, x):
    # x: (B, C, H, W) — NCHW like PyTorch
    B, C, Himg, Wimg = x.shape
    P = params["patch"]
    D = params["embed_dim"]
    gh, gw = Himg // P, Wimg // P
    num_patches = gh * gw
    heads = params["num_heads"]

    # Patch-embed conv (stride==kernel==P) as unfold + matmul (lane-dense D=128 output).
    patches = (x.reshape(B, C, gh, P, gw, P)
                .transpose(0, 2, 4, 1, 3, 5)
                .reshape(B * num_patches, C * P * P))
    tokens = pallas_linear(patches, params["patch_w"], params["patch_b"])
    tokens = tokens.reshape(B, num_patches, D)

    cls = jnp.broadcast_to(params["cls_token"], (B, 1, D))
    h = jnp.concatenate([cls, tokens], axis=1) + params["pos_embed"]  # (B, N, D)
    Ntok = h.shape[1]

    for blk in params["blocks"]:
        # attention sub-block (LN1 + QKV + MHSA + proj + residual) in one kernel
        h = fused_attention_block(h, blk, heads=heads)
        # MLP sub-block (LN2 + fc1 + GELU + fc2 + residual) in one kernel
        h = fused_mlp_block(h.reshape(B * Ntok, D), blk).reshape(B, Ntok, D)

    # Class-token pooling; final LN fused into the head matmul (LN is per-token so
    # LN(h)[:,0] == LN(h[:,0])).
    cls_out = h[:, 0]                                                  # (B, D)
    logits = fused_ln_head(cls_out, params["ln_g"], params["ln_b"],
                           params["head_w"], params["head_b"])
    return logits


# ---------------------------------------------------------------------------
if __name__ == "__main__":
    # Scaled-down ViT config consistent with the module's structure:
    # patch 16, class-token pooling, pre-LN blocks, 219-class head.
    # embed_dim chosen as a multiple of 128 so all hot activations are lane-dense.
    NUM_CLASSES = 219
    B, C, IMG, PATCH = 2, 3, 32, 16
    EMBED_DIM, DEPTH, HEADS, MLP_DIM = 128, 2, 4, 512

    key = jax.random.PRNGKey(0)
    pkey, xkey = jax.random.split(key)
    params = init_vit_params(pkey, in_chans=C, patch=PATCH, img=IMG,
                             embed_dim=EMBED_DIM, depth=DEPTH, num_heads=HEADS,
                             mlp_dim=MLP_DIM, num_classes=NUM_CLASSES)
    x = jax.random.normal(xkey, (B, C, IMG, IMG), jnp.float32)

    logits = jax.block_until_ready(vit_forward(params, x))
    assert logits.shape == (B, NUM_CLASSES), logits.shape
    assert bool(jnp.all(jnp.isfinite(logits)))
    print("KERNEL_OK")
</pallas_src>

<mosaic_0001>
module attributes {stable_mosaic.version = 11 : i64} {
  func.func @_linear_kernel(%arg0: i32, %arg1: memref<8x768xf32, #tpu.memory_space<vmem>>, %arg2: memref<768x128xf32, #tpu.memory_space<vmem>>, %arg3: memref<1x128xf32, #tpu.memory_space<vmem>>, %arg4: memref<8x128xf32, #tpu.memory_space<vmem>>) attributes {dimension_semantics = [#tpu.dimension_semantics<parallel>], iteration_bounds = array<i64: 1>, scalar_prefetch = 0 : i64, scratch_operands = 0 : i64, tpu.core_type = #tpu.core_type<tc>, window_params = [{transform_indices = @transform_0, window_bounds = array<i64: 8, 768>}, {pipeline_mode = #tpu.pipeline_mode<synchronous>, transform_indices = @transform_1, window_bounds = array<i64: 768, 128>}, {pipeline_mode = #tpu.pipeline_mode<synchronous>, transform_indices = @transform_2, window_bounds = array<i64: 1, 128>}, {transform_indices = @transform_3, window_bounds = array<i64: 8, 128>}]} {
    %c0 = arith.constant 0 : index
    %c0_0 = arith.constant 0 : index
    %0 = vector.load %arg1[%c0, %c0_0] : memref<8x768xf32, #tpu.memory_space<vmem>>, vector<8x768xf32>
    %1 = arith.truncf %0 : vector<8x768xf32> to vector<8x768xbf16>
    %c0_1 = arith.constant 0 : index
    %c0_2 = arith.constant 0 : index
    %2 = vector.load %arg2[%c0_1, %c0_2] : memref<768x128xf32, #tpu.memory_space<vmem>>, vector<768x128xf32>
    %3 = arith.truncf %2 : vector<768x128xf32> to vector<768x128xbf16>
    %cst = arith.constant dense<0.000000e+00> : vector<8x128xf32>
    %4 = tpu.matmul %1, %3, %cst {dimension_numbers = #tpu.dot_dimension_numbers<[1], [0], [0], [1], [0, 0, 1, 1], [], []>} : vector<8x768xbf16>, vector<768x128xbf16>, vector<8x128xf32> -> vector<8x128xf32>
    %c0_3 = arith.constant 0 : index
    %c0_4 = arith.constant 0 : index
    %5 = vector.load %arg3[%c0_3, %c0_4] : memref<1x128xf32, #tpu.memory_space<vmem>>, vector<1x128xf32>
    %6 = vector.broadcast %5 : vector<1x128xf32> to vector<8x128xf32>
    %7 = arith.addf %4, %6 : vector<8x128xf32>
    %c0_5 = arith.constant 0 : index
    %c0_6 = arith.constant 0 : index
    %8 = vector.load %arg4[%c0_5, %c0_6] : memref<8x128xf32, #tpu.memory_space<vmem>>, vector<8x128xf32>
    tpu.vector_store %arg4[%c0_5, %c0_6], %7 {strides = array<i32>} : memref<8x128xf32, #tpu.memory_space<vmem>>, vector<8x128xf32>,
    return
  }
  func.func @transform_0(%arg0: i32) -> (i32, i32) {
    %c0_i32 = arith.constant 0 : i32
    %c0_i32_0 = arith.constant 0 : i32
    return %arg0, %c0_i32 : i32, i32
  }
  func.func @transform_1(%arg0: i32) -> (i32, i32) {
    %c0_i32 = arith.constant 0 : i32
    %c0_i32_0 = arith.constant 0 : i32
    %c0_i32_1 = arith.constant 0 : i32
    return %c0_i32, %c0_i32_0 : i32, i32
  }
  func.func @transform_2(%arg0: i32) -> (i32, i32) {
    %c0_i32 = arith.constant 0 : i32
    %c0_i32_0 = arith.constant 0 : i32
    %c0_i32_1 = arith.constant 0 : i32
    return %c0_i32, %c0_i32_0 : i32, i32
  }
  func.func @transform_3(%arg0: i32) -> (i32, i32) {
    %c0_i32 = arith.constant 0 : i32
    %c0_i32_0 = arith.constant 0 : i32
    return %arg0, %c0_i32 : i32, i32
  }
}

</mosaic_0001>

<llo_original>
// kernel: tpu_custom_call.1
$region0: #{tpu_custom_call.1}
  #allocation0 [shape = 'u32[]', space=smem, size = 0x4, offset = 0x4, fixed_abs, tag = 'smem constant byte address 0x4 - core index']
  #allocation1 [shape = 'u32[144,128]{1,0:T(1,128)}', space=vmem, size = 0x12000, scoped, tag = 'internal scratch']
  %s0 = inlined_call_operand.hbm [shape: f32[8,768], index: 0, kind: input, shape index: {}]
  %s1 = inlined_call_operand.hbm [shape: f32[768,128], index: 1, kind: input, shape index: {}]
  %s2 = inlined_call_operand.vmem [shape: f32[1,128], index: 2, kind: input, shape index: {}]
  %s3 = inlined_call_operand.hbm [shape: f32[8,128], index: 3, kind: output, shape index: {}]
  %s4 = sld [smem:[#allocation0]]
  $region30: #{tpu_custom_call.1} parent=0
    _
  %s6 = ssub.s32 1, %s4
  %s7 = scalar_select 0, %s6, %s4
  $region1: #{tpu_custom_call.1} parent=0
    #allocation2 [shape = 'u8[24576]{0}', space=vmem, size = 0x6000, scoped, tag = 'input window, operand 0, single buffered']
    #allocation3 [shape = 's32[1]{0}', space=sflag, size = 0x4, scoped, tag = 'scoped memory for tpu_custom_call.1']
    #allocation4 [shape = 's32[1]{0}', space=sflag, size = 0x4, scoped, tag = 'scoped memory for tpu_custom_call.1']
    #allocation5 [shape = 'u8[393216]{0}', space=vmem, size = 0x60000, scoped, tag = 'input window, operand 1, single buffered']
    #allocation6 [shape = 's32[1]{0}', space=sflag, size = 0x4, scoped, tag = 'scoped memory for tpu_custom_call.1']
    #allocation7 [shape = 'u8[4096]{0}', space=vmem, size = 0x1000, scoped, tag = 'output window, operand 0, single buffered']
    %8 = vsyncpa [#allocation3], 0
    %9 = vsyncpa [#allocation6], 0
    %10 = vsyncpa [#allocation4], 0
    // Predicated region
    $region2: #{tpu_custom_call.1} parent=1 // pred_check
      _
    $region3: #{tpu_custom_call.1} parent=1 // pred_check_branch
      %12 = sbr.rel (0) target = $region5
    $region4: #{tpu_custom_call.1} parent=1 // pred_region
      %s14 = ssub.s32 768, 768
      %15 = vsyncadd [#allocation3], %s14
      %s17 = sshll.u32 [#allocation2], 4
      %s18 = int_to_ptr.vmem [resolvable:$true] %s17
      %20 = dma.hbm_to_vmem [thread:$0]  %s0, 768, %s18, [#allocation3]
    $region5: #{tpu_custom_call.1} parent=1 // pred_fallthru
      _
    // Predicated region
    $region6: #{tpu_custom_call.1} parent=1 // pred_check
      _
    $region7: #{tpu_custom_call.1} parent=1 // pred_check_branch
      %22 = sbr.rel (0) target = $region9
    $region8: #{tpu_custom_call.1} parent=1 // pred_region
      %s24 = ssub.s32 12288, 12288
      %25 = vsyncadd [#allocation6], %s24
      %s26 = sshll.u32 [#allocation5], 4
      %s27 = int_to_ptr.vmem [resolvable:$true] %s26
      %32 = dma.hbm_to_vmem [thread:$0]  %s1, 12288, %s27, [#allocation6], 128, 128, 8
    $region9: #{tpu_custom_call.1} parent=1 // pred_fallthru
      _
    // Predicated region
    $region10: #{tpu_custom_call.1} parent=1 // pred_check
      _
    $region11: #{tpu_custom_call.1} parent=1 // pred_check_branch
      %34 = sbr.rel (0) target = $region13
    $region12: #{tpu_custom_call.1} parent=1 // pred_region
      _
    $region13: #{tpu_custom_call.1} parent=1 // pred_fallthru
      _
    // Predicated region
    $region14: #{tpu_custom_call.1} parent=1 // pred_check
      _
    $region15: #{tpu_custom_call.1} parent=1 // pred_check_branch
      %36 = sbr.rel (0) target = $region17
    $region16: #{tpu_custom_call.1} parent=1 // pred_region
      %37 = dma.done [#allocation3], 768
    $region17: #{tpu_custom_call.1} parent=1 // pred_fallthru
      _
    // Predicated region
    $region18: #{tpu_custom_call.1} parent=1 // pred_check
      _
    $region19: #{tpu_custom_call.1} parent=1 // pred_check_branch
      %39 = sbr.rel (0) target = $region21
    $region20: #{tpu_custom_call.1} parent=1 // pred_region
      %40 = dma.done [#allocation6], 12288
    $region21: #{tpu_custom_call.1} parent=1 // pred_fallthru
      _
    %v42 = vld [vmem:[#allocation2] sm:$0xff]
    %v43 = vld [vmem:[#allocation2 + $0x8] sm:$0xff]
    %v44 = vld [vmem:[#allocation2 + $0x10] sm:$0xff]
    %v45 = vld [vmem:[#allocation2 + $0x18] sm:$0xff]
    %v46 = vld [vmem:[#allocation2 + $0x20] sm:$0xff]
    %v47 = vld [vmem:[#allocation2 + $0x28] sm:$0xff]
    %v48 = vpack.c.bf16 %v42, %v42
    %v49 = vpack.c.bf16 %v43, %v43
    %v50 = vpack.c.bf16 %v44, %v44
    %v51 = vpack.c.bf16 %v45, %v45
    %v52 = vpack.c.bf16 %v46, %v46
    %v53 = vpack.c.bf16 %v47, %v47
    %v54 = vld [vmem:[#allocation5] sm:$0xff]
    %v55 = vld [vmem:[#allocation5 + $0x8] sm:$0xff]
    %v56 = vld [vmem:[#allocation5 + $0x10] sm:$0xff]
    %v57 = vld [vmem:[#allocation5 + $0x18] sm:$0xff]
    %v58 = vld [vmem:[#allocation5 + $0x20] sm:$0xff]
    %v59 = vld [vmem:[#allocation5 + $0x28] sm:$0xff]
    %v60 = vld [vmem:[#allocation5 + $0x30] sm:$0xff]
    %v61 = vld [vmem:[#allocation5 + $0x38] sm:$0xff]
    %v62 = vld [vmem:[#allocation5 + $0x40] sm:$0xff]
    %v63 = vld [vmem:[#allocation5 + $0x48] sm:$0xff]
    %v64 = vld [vmem:[#allocation5 + $0x50] sm:$0xff]
    %v65 = vld [vmem:[#allocation5 + $0x58] sm:$0xff]
    %v66 = vld [vmem:[#allocation5 + $0x60] sm:$0xff]
    %v67 = vld [vmem:[#allocation5 + $0x68] sm:$0xff]
    %v68 = vld [vmem:[#allocation5 + $0x70] sm:$0xff]
    %v69 = vld [vmem:[#allocation5 + $0x78] sm:$0xff]
    %v70 = vld [vmem:[#allocation5 + $0x80] sm:$0xff]
    %v71 = vld [vmem:[#allocation5 + $0x88] sm:$0xff]
    %v72 = vld [vmem:[#allocation5 + $0x90] sm:$0xff]
    %v73 = vld [vmem:[#allocation5 + $0x98] sm:$0xff]
    %v74 = vld [vmem:[#allocation5 + $0xa0] sm:$0xff]
    %v75 = vld [vmem:[#allocation5 + $0xa8] sm:$0xff]
    %v76 = vld [vmem:[#allocation5 + $0xb0] sm:$0xff]
    %v77 = vld [vmem:[#allocation5 + $0xb8] sm:$0xff]
    %v78 = vld [vmem:[#allocation5 + $0xc0] sm:$0xff]
    %v79 = vld [vmem:[#allocation5 + $0xc8] sm:$0xff]
    %v80 = vld [vmem:[#allocation5 + $0xd0] sm:$0xff]
    %v81 = vld [vmem:[#allocation5 + $0xd8] sm:$0xff]
    %v82 = vld [vmem:[#allocation5 + $0xe0] sm:$0xff]
    %v83 = vld [vmem:[#allocation5 + $0xe8] sm:$0xff]
    %v84 = vld [vmem:[#allocation5 + $0xf0] sm:$0xff]
    %v85 = vld [vmem:[#allocation5 + $0xf8] sm:$0xff]
    %v86 = vld [vmem:[#allocation5 + $0x100] sm:$0xff]
    %v87 = vld [vmem:[#allocation5 + $0x108] sm:$0xff]
    %v88 = vld [vmem:[#allocation5 + $0x110] sm:$0xff]
    %v89 = vld [vmem:[#allocation5 + $0x118] sm:$0xff]
    %v90 = vld [vmem:[#allocation5 + $0x120] sm:$0xff]
    %v91 = vld [vmem:[#allocation5 + $0x128] sm:$0xff]
    %v92 = vld [vmem:[#allocation5 + $0x130] sm:$0xff]
    %v93 = vld [vmem:[#allocation5 + $0x138] sm:$0xff]
    %v94 = vld [vmem:[#allocation5 + $0x140] sm:$0xff]
    %v95 = vld [vmem:[#allocation5 + $0x148] sm:$0xff]
    %v96 = vld [vmem:[#allocation5 + $0x150] sm:$0xff]
    %v97 = vld [vmem:[#allocation5 + $0x158] sm:$0xff]
    %v98 = vld [vmem:[#allocation5 + $0x160] sm:$0xff]
    %v99 = vld [vmem:[#allocation5 + $0x168] sm:$0xff]
    %v100 = vld [vmem:[#allocation5 + $0x170] sm:$0xff]
    %v101 = vld [vmem:[#allocation5 + $0x178] sm:$0xff]
    %v102 = vld [vmem:[#allocation5 + $0x180] sm:$0xff]
    %v103 = vld [vmem:[#allocation5 + $0x188] sm:$0xff]
    %v104 = vld [vmem:[#allocation5 + $0x190] sm:$0xff]
    %v105 = vld [vmem:[#allocation5 + $0x198] sm:$0xff]
    %v106 = vld [vmem:[#allocation5 + $0x1a0] sm:$0xff]
    %v107 = vld [vmem:[#allocation5 + $0x1a8] sm:$0xff]
    %v108 = vld [vmem:[#allocation5 + $0x1b0] sm:$0xff]
    %v109 = vld [vmem:[#allocation5 + $0x1b8] sm:$0xff]
    %v110 = vld [vmem:[#allocation5 + $0x1c0] sm:$0xff]
    %v111 = vld [vmem:[#allocation5 + $0x1c8] sm:$0xff]
    %v112 = vld [vmem:[#allocation5 + $0x1d0] sm:$0xff]
    %v113 = vld [vmem:[#allocation5 + $0x1d8] sm:$0xff]
    %v114 = vld [vmem:[#allocation5 + $0x1e0] sm:$0xff]
    %v115 = vld [vmem:[#allocation5 + $0x1e8] sm:$0xff]
    %v116 = vld [vmem:[#allocation5 + $0x1f0] sm:$0xff]
    %v117 = vld [vmem:[#allocation5 + $0x1f8] sm:$0xff]
    %v118 = vld [vmem:[#allocation5 + $0x200] sm:$0xff]
    %v119 = vld [vmem:[#allocation5 + $0x208] sm:$0xff]
    %v120 = vld [vmem:[#allocation5 + $0x210] sm:$0xff]
    %v121 = vld [vmem:[#allocation5 + $0x218] sm:$0xff]
    %v122 = vld [vmem:[#allocation5 + $0x220] sm:$0xff]
    %v123 = vld [vmem:[#allocation5 + $0x228] sm:$0xff]
    %v124 = vld [vmem:[#allocation5 + $0x230] sm:$0xff]
    %v125 = vld [vmem:[#allocation5 + $0x238] sm:$0xff]
    %v126 = vld [vmem:[#allocation5 + $0x240] sm:$0xff]
    %v127 = vld [vmem:[#allocation5 + $0x248] sm:$0xff]
    %v128 = vld [vmem:[#allocation5 + $0x250] sm:$0xff]
    %v129 = vld [vmem:[#allocation5 + $0x258] sm:$0xff]
    %v130 = vld [vmem:[#allocation5 + $0x260] sm:$0xff]
    %v131 = vld [vmem:[#allocation5 + $0x268] sm:$0xff]
    %v132 = vld [vmem:[#allocation5 + $0x270] sm:$0xff]
    %v133 = vld [vmem:[#allocation5 + $0x278] sm:$0xff]
    %v134 = vld [vmem:[#allocation5 + $0x280] sm:$0xff]
    %v135 = vld [vmem:[#allocation5 + $0x288] sm:$0xff]
    %v136 = vld [vmem:[#allocation5 + $0x290] sm:$0xff]
    %v137 = vld [vmem:[#allocation5 + $0x298] sm:$0xff]
    %v138 = vld [vmem:[#allocation5 + $0x2a0] sm:$0xff]
    %v139 = vld [vmem:[#allocation5 + $0x2a8] sm:$0xff]
    %v140 = vld [vmem:[#allocation5 + $0x2b0] sm:$0xff]
    %v141 = vld [vmem:[#allocation5 + $0x2b8] sm:$0xff]
    %v142 = vld [vmem:[#allocation5 + $0x2c0] sm:$0xff]
    %v143 = vld [vmem:[#allocation5 + $0x2c8] sm:$0xff]
    %v144 = vld [vmem:[#allocation5 + $0x2d0] sm:$0xff]
    %v145 = vld [vmem:[#allocation5 + $0x2d8] sm:$0xff]
    %v146 = vld [vmem:[#allocation5 + $0x2e0] sm:$0xff]
    %v147 = vld [vmem:[#allocation5 + $0x2e8] sm:$0xff]
    %v148 = vld [vmem:[#allocation5 + $0x2f0] sm:$0xff]
    %v149 = vld [vmem:[#allocation5 + $0x2f8] sm:$0xff]
    %v150 = vpack.c.bf16 %v55, %v54
    %v151 = vpack.c.bf16 %v57, %v56
    %v152 = vpack.c.bf16 %v59, %v58
    %v153 = vpack.c.bf16 %v61, %v60
    %v154 = vpack.c.bf16 %v63, %v62
    %v155 = vpack.c.bf16 %v65, %v64
    %v156 = vpack.c.bf16 %v67, %v66
    %v157 = vpack.c.bf16 %v69, %v68
    %v158 = vpack.c.bf16 %v71, %v70
    %v159 = vpack.c.bf16 %v73, %v72
    %v160 = vpack.c.bf16 %v75, %v74
    %v161 = vpack.c.bf16 %v77, %v76
    %v162 = vpack.c.bf16 %v79, %v78
    %v163 = vpack.c.bf16 %v81, %v80
    %v164 = vpack.c.bf16 %v83, %v82
    %v165 = vpack.c.bf16 %v85, %v84
    %v166 = vpack.c.bf16 %v87, %v86
    %v167 = vpack.c.bf16 %v89, %v88
    %v168 = vpack.c.bf16 %v91, %v90
    %v169 = vpack.c.bf16 %v93, %v92
    %v170 = vpack.c.bf16 %v95, %v94
    %v171 = vpack.c.bf16 %v97, %v96
    %v172 = vpack.c.bf16 %v99, %v98
    %v173 = vpack.c.bf16 %v101, %v100
    %v174 = vpack.c.bf16 %v103, %v102
    %v175 = vpack.c.bf16 %v105, %v104
    %v176 = vpack.c.bf16 %v107, %v106
    %v177 = vpack.c.bf16 %v109, %v108
    %v178 = vpack.c.bf16 %v111, %v110
    %v179 = vpack.c.bf16 %v113, %v112
    %v180 = vpack.c.bf16 %v115, %v114
    %v181 = vpack.c.bf16 %v117, %v116
    %v182 = vpack.c.bf16 %v119, %v118
    %v183 = vpack.c.bf16 %v121, %v120
    %v184 = vpack.c.bf16 %v123, %v122
    %v185 = vpack.c.bf16 %v125, %v124
    %v186 = vpack.c.bf16 %v127, %v126
    %v187 = vpack.c.bf16 %v129, %v128
    %v188 = vpack.c.bf16 %v131, %v130
    %v189 = vpack.c.bf16 %v133, %v132
    %v190 = vpack.c.bf16 %v135, %v134
    %v191 = vpack.c.bf16 %v137, %v136
    %v192 = vpack.c.bf16 %v139, %v138
    %v193 = vpack.c.bf16 %v141, %v140
    %v194 = vpack.c.bf16 %v143, %v142
    %v195 = vpack.c.bf16 %v145, %v144
    %v196 = vpack.c.bf16 %v147, %v146
    %v197 = vpack.c.bf16 %v149, %v148
    %v198 = vld [vmem:[%s2] sm:$0x1]
    %v200 = vlaneseq
    %v201 = vshrl.u32 %v200, 7
    %v202 = vsub.s32 0, %v201
    %v203 = vrot.slane %v198, %v202
    %205 = vmatprep.subr.bf16.mxu0 0
    %206 = vmatpush1.bf16.msra.mxu0 %v150
    %207 = vmatprep.subr.bf16.mxu0 0
    %208 = vmatpush1.bf16.msra.mxu0 %v151
    %209 = vmatprep.subr.bf16.mxu0 0
    %210 = vmatpush1.bf16.msra.mxu0 %v152
    %211 = vmatprep.subr.bf16.mxu0 0
    %212 = vmatpush1.bf16.msra.mxu0 %v153
    %213 = vmatprep.subr.bf16.mxu0 0
    %214 = vmatpush1.bf16.msra.mxu0 %v154
    %215 = vmatprep.subr.bf16.mxu0 0
    %216 = vmatpush1.bf16.msra.mxu0 %v155
    %217 = vmatprep.subr.bf16.mxu0 0
    %218 = vmatpush1.bf16.msra.mxu0 %v156
    %219 = vmatprep.subr.bf16.mxu0 0
    %220 = vmatpush1.bf16.msra.mxu0 %v157
    %221 = vmatprep.subr.bf16.mxu0 0
    %222 = vmatpush1.bf16.msra.mxu0 %v158
    %223 = vmatprep.subr.bf16.mxu0 0
    %224 = vmatpush1.bf16.msra.mxu0 %v159
    %225 = vmatprep.subr.bf16.mxu0 0
    %226 = vmatpush1.bf16.msra.mxu0 %v160
    %227 = vmatprep.subr.bf16.mxu0 0
    %228 = vmatpush1.bf16.msra.mxu0 %v161
    %229 = vmatprep.subr.bf16.mxu0 0
    %230 = vmatpush1.bf16.msra.mxu0 %v162
    %231 = vmatprep.subr.bf16.mxu0 0
    %232 = vmatpush1.bf16.msra.mxu0 %v163
    %233 = vmatprep.subr.bf16.mxu0 0
    %234 = vmatpush1.bf16.msra.mxu0 %v164
    %235 = vmatprep.subr.bf16.mxu0 0
    %236 = vmatpush1.bf16.msra.mxu0 %v165
    %237 = vmatprep.mubr.bf16.mxu0 %v49
    %238 = vmatmul.mubr.bf16.gmra.mrb[0].mxu0 %v48
    %v239 = vpop.f32.mrb[0].mxu0
    %v240 = vadd.f32 %v203, %v239
    %v241 = vpop.f32.mrb[0].mxu0
    %v242 = vpop.f32.mrb[0].mxu0
    %v243 = vpop.f32.mrb[0].mxu0
    %244 = vdwg.mxu0
    %245 = vmatprep.subr.bf16.mxu0 0
    %246 = vmatpush1.bf16.msra.mxu0 %v166
    %247 = vmatprep.subr.bf16.mxu0 0
    %248 = vmatpush1.bf16.msra.mxu0 %v167
    %249 = vmatprep.subr.bf16.mxu0 0
    %250 = vmatpush1.bf16.msra.mxu0 %v168
    %251 = vmatprep.subr.bf16.mxu0 0
    %252 = vmatpush1.bf16.msra.mxu0 %v169
    %253 = vmatprep.subr.bf16.mxu0 0
    %254 = vmatpush1.bf16.msra.mxu0 %v170
    %255 = vmatprep.subr.bf16.mxu0 0
    %256 = vmatpush1.bf16.msra.mxu0 %v171
    %257 = vmatprep.subr.bf16.mxu0 0
    %258 = vmatpush1.bf16.msra.mxu0 %v172
    %259 = vmatprep.subr.bf16.mxu0 0
    %260 = vmatpush1.bf16.msra.mxu0 %v173
    %261 = vmatprep.subr.bf16.mxu0 0
    %262 = vmatpush1.bf16.msra.mxu0 %v174
    %263 = vmatprep.subr.bf16.mxu0 0
    %264 = vmatpush1.bf16.msra.mxu0 %v175
    %265 = vmatprep.subr.bf16.mxu0 0
    %266 = vmatpush1.bf16.msra.mxu0 %v176
    %267 = vmatprep.subr.bf16.mxu0 0
    %268 = vmatpush1.bf16.msra.mxu0 %v177
    %269 = vmatprep.subr.bf16.mxu0 0
    %270 = vmatpush1.bf16.msra.mxu0 %v178
    %271 = vmatprep.subr.bf16.mxu0 0
    %272 = vmatpush1.bf16.msra.mxu0 %v179
    %273 = vmatprep.subr.bf16.mxu0 0
    %274 = vmatpush1.bf16.msra.mxu0 %v180
    %275 = vmatprep.subr.bf16.mxu0 0
    %276 = vmatpush1.bf16.msra.mxu0 %v181
    %277 = vmatprep.mubr.bf16.mxu0 %v51
    %278 = vmatmul.mubr.bf16.gmra.mrb[0].mxu0 %v50
    %v279 = vpop.f32.mrb[0].mxu0
    %v280 = vadd.f32 %v240, %v279
    %v281 = vpop.f32.mrb[0].mxu0
    %v282 = vpop.f32.mrb[0].mxu0
    %v283 = vpop.f32.mrb[0].mxu0
    %284 = vdwg.mxu0
    %285 = vmatprep.subr.bf16.mxu0 0
    %286 = vmatpush1.bf16.msra.mxu0 %v182
    %287 = vmatprep.subr.bf16.mxu0 0
    %288 = vmatpush1.bf16.msra.mxu0 %v183
    %289 = vmatprep.subr.bf16.mxu0 0
    %290 = vmatpush1.bf16.msra.mxu0 %v184
    %291 = vmatprep.subr.bf16.mxu0 0
    %292 = vmatpush1.bf16.msra.mxu0 %v185
    %293 = vmatprep.subr.bf16.mxu0 0
    %294 = vmatpush1.bf16.msra.mxu0 %v186
    %295 = vmatprep.subr.bf16.mxu0 0
    %296 = vmatpush1.bf16.msra.mxu0 %v187
    %297 = vmatprep.subr.bf16.mxu0 0
    %298 = vmatpush1.bf16.msra.mxu0 %v188
    %299 = vmatprep.subr.bf16.mxu0 0
    %300 = vmatpush1.bf16.msra.mxu0 %v189
    %301 = vmatprep.subr.bf16.mxu0 0
    %302 = vmatpush1.bf16.msra.mxu0 %v190
    %303 = vmatprep.subr.bf16.mxu0 0
    %304 = vmatpush1.bf16.msra.mxu0 %v191
    %305 = vmatprep.subr.bf16.mxu0 0
    %306 = vmatpush1.bf16.msra.mxu0 %v192
    %307 = vmatprep.subr.bf16.mxu0 0
    %308 = vmatpush1.bf16.msra.mxu0 %v193
    %309 = vmatprep.subr.bf16.mxu0 0
    %310 = vmatpush1.bf16.msra.mxu0 %v194
    %311 = vmatprep.subr.bf16.mxu0 0
    %312 = vmatpush1.bf16.msra.mxu0 %v195
    %313 = vmatprep.subr.bf16.mxu0 0
    %314 = vmatpush1.bf16.msra.mxu0 %v196
    %315 = vmatprep.subr.bf16.mxu0 0
    %316 = vmatpush1.bf16.msra.mxu0 %v197
    %317 = vmatprep.mubr.bf16.mxu0 %v53
    %318 = vmatmul.mubr.bf16.gmra.mrb[0].mxu0 %v52
    %v319 = vpop.f32.mrb[0].mxu0
    %v320 = vadd.f32 %v280, %v319
    %v321 = vpop.f32.mrb[0].mxu0
    %v322 = vpop.f32.mrb[0].mxu0
    %v323 = vpop.f32.mrb[0].mxu0
    %324 = vdwg.mxu0
    %325 = vst [vmem:[#allocation7] sm:$0xff] %v320
    // Predicated region
    $region22: #{tpu_custom_call.1} parent=1 // pred_check
      _
    $region23: #{tpu_custom_call.1} parent=1 // pred_check_branch
      %327 = sbr.rel (0) target = $region25
    $region24: #{tpu_custom_call.1} parent=1 // pred_region
      %s329 = ssub.s32 128, 128
      %330 = vsyncadd [#allocation4], %s329
      %s332 = sshll.u32 [#allocation7], 4
      %s333 = int_to_ptr.vmem [resolvable:$true] %s332
      %335 = dma.vmem_to_hbm [thread:$0]  %s333, 128, %s3, [#allocation4]
    $region25: #{tpu_custom_call.1} parent=1 // pred_fallthru
      _
    // Predicated region
    $region26: #{tpu_custom_call.1} parent=1 // pred_check
      _
    $region27: #{tpu_custom_call.1} parent=1 // pred_check_branch
      %337 = sbr.rel (0) target = $region29
    $region28: #{tpu_custom_call.1} parent=1 // pred_region
      %338 = dma.done [#allocation4], 128
    $region29: #{tpu_custom_call.1} parent=1 // pred_fallthru
      _
    %339 = vsyncpa [#allocation3], 1
    %340 = vsyncpa [#allocation6], 1
    %341 = vsyncpa [#allocation4], 1

</llo_original>
